<compile_context>
chip_gen: v6e
topology: v6e:2x2x1
jax: 0.10.0
libtpu: 0.0.40
codegen_flags: <defaults>
</compile_context>

<pallas_src>
import functools

import jax
import jax.numpy as jnp
from jax.experimental import pallas as pl
from jax.experimental.pallas import tpu as pltpu


def _se_gate_kernel(gate_ref, x_ref, o_ref, *, bf16_mul):
    # gate_ref: (tc, 1)  -- per-step pre-sigmoid gate rows
    # x_ref   : (tc, HW) -- feature-map rows for this grid step
    # o_ref   : (tc, HW)
    g = jax.nn.sigmoid(gate_ref[...].astype(jnp.float32))  # (tc, 1), EUP
    x = x_ref[...]
    if bf16_mul:
        # native bf16 VALU (v6e/v7x): halve VPU work / vreg pressure
        o_ref[...] = (g.astype(x.dtype) * x).astype(o_ref.dtype)
    else:
        o_ref[...] = (g * x.astype(jnp.float32)).astype(o_ref.dtype)


def _round_up(v, m):
    return (v + m - 1) // m * m


def _device_kind():
    try:
        return str(getattr(jax.devices()[0], "device_kind", "")).lower()
    except Exception:
        return ""


def _num_tensorcores():
    """TensorCores per device: 2 on v7x, 1 on v5e/v6e. Robust best-effort."""
    # 1) Pallas TPU info (preferred).
    try:
        info = pltpu.get_tpu_info()
        for attr in ("num_tensorcores", "tensorcore_count", "num_cores",
                     "core_count", "tensor_cores"):
            v = getattr(info, attr, None)
            if isinstance(v, int) and v >= 1:
                return v
    except Exception:
        pass
    # 2) Device attribute.
    try:
        dev = jax.devices()[0]
        for attr in ("num_cores", "core_count"):
            v = getattr(dev, attr, None)
            if isinstance(v, int) and v >= 1:
                return v
    except Exception:
        pass
    # 3) device_kind string match.
    kind = _device_kind()
    if "v7" in kind:
        return 2
    return 1


def _pick_row_tile(nc, hw, itemsize, min_blocks, block_budget_bytes):
    """Largest row tile that (a) divides nc, (b) is sublane-aligned for the
    dtype, (c) keeps one block under the budget and (d) yields at least
    `min_blocks` grid steps when possible."""
    align = max(8, 32 // max(1, itemsize))  # f32: 8, bf16: 16, int8/fp8: 32
    if nc % align != 0:
        # Whole-array block is always legal (block extent == array extent).
        # TODO(synk): for very large unaligned N*C this ignores the VMEM budget.
        return nc
    row_bytes = max(1, hw * itemsize)
    max_rows = max(align, (block_budget_bytes // row_bytes) // align * align)
    for nblk in range(1, nc // align + 1):
        if nc % nblk:
            continue
        tc = nc // nblk
        if tc % align == 0 and tc <= max_rows and nblk >= min_blocks:
            return tc  # first hit == largest admissible tile
    return align  # smallest aligned tile (only hit for very large HW)


def _padded_block_bytes(rows, cols, itemsize):
    """VMEM footprint of one (rows, cols) block after (sublane, lane) padding."""
    sub = max(8, 32 // max(1, itemsize))
    return _round_up(rows, sub) * _round_up(cols, 128) * itemsize


def se_gate(x160, x156, *, block_budget_bytes=4 << 20):
    """sigmoid(x160) * x156 with NCHW inputs.

    x160: (N, C, 1, 1) per-channel gate (pre-sigmoid)
    x156: (N, C, H, W) feature map
    """
    N, C, H, W = x156.shape
    assert x160.shape == (N, C, 1, 1)
    HW = H * W
    NC = N * C

    gate2d = x160.reshape(NC, 1)
    x2d = x156.reshape(NC, HW)

    itemsize = jnp.dtype(x156.dtype).itemsize
    gate_itemsize = jnp.dtype(x160.dtype).itemsize
    total_x_bytes = NC * HW * itemsize

    # One step per TensorCore; for big feature maps force >=2 steps so the
    # input DMA and output writeback overlap across the pipeline.
    min_blocks = _num_tensorcores()
    if total_x_bytes > (2 << 20):
        min_blocks = max(min_blocks, 2)

    tc = _pick_row_tile(NC, HW, itemsize, min_blocks, block_budget_bytes)
    grid = (NC // tc,)

    # bf16 multiply only on chips with a bf16 VALU (not v5e).
    bf16_mul = (x156.dtype == jnp.bfloat16) and ("v5" not in _device_kind())
    kernel = functools.partial(_se_gate_kernel, bf16_mul=bf16_mul)

    # VMEM accounting: in + out blocks double-buffered, gate blocks
    # double-buffered (lane-padded to 128), plus margin for compiler scratch.
    x_blk = _padded_block_bytes(tc, HW, itemsize)
    g_blk = _padded_block_bytes(tc, 1, gate_itemsize)
    vmem_need = 2 * 2 * x_blk + 2 * g_blk
    vmem_limit = min(64 << 20, max(16 << 20, vmem_need + (4 << 20)))

    cost = pl.CostEstimate(
        flops=NC * HW,                       # the broadcast multiply
        transcendentals=NC,                  # one sigmoid per channel
        bytes_accessed=2 * NC * HW * itemsize + NC * gate_itemsize,
    )

    out2d = pl.pallas_call(
        kernel,
        out_shape=jax.ShapeDtypeStruct((NC, HW), x156.dtype),
        grid_spec=pl.GridSpec(
            grid=grid,
            in_specs=[
                pl.BlockSpec((tc, 1), lambda i: (i, 0)),   # per-step gate rows
                pl.BlockSpec((tc, HW), lambda i: (i, 0)),  # feature-map rows
            ],
            out_specs=pl.BlockSpec((tc, HW), lambda i: (i, 0)),
        ),
        # "parallel" lets Mosaic shard the (independent) row-tile steps across
        # TensorCores on multi-TC chips (v7x); harmless elsewhere.
        compiler_params=pltpu.CompilerParams(
            dimension_semantics=("parallel",),
            vmem_limit_bytes=vmem_limit,
        ),
        cost_estimate=cost,
    )(gate2d, x2d)

    return out2d.reshape(N, C, H, W)


if __name__ == "__main__":
    key = jax.random.PRNGKey(0)
    k1, k2 = jax.random.split(key)

    # shapes from the module spec: x156 = (1, 672, 14, 14), x160 = (1, 672, 1, 1)
    N, C, H, W = 1, 672, 14, 14
    x156 = jax.random.normal(k1, (N, C, H, W), dtype=jnp.float32)
    x160 = jax.random.normal(k2, (N, C, 1, 1), dtype=jnp.float32)

    out = jax.block_until_ready(se_gate(x160, x156))

    # reference check in plain JAX
    ref = jax.nn.sigmoid(x160) * x156
    assert out.shape == (N, C, H, W)
    assert jnp.allclose(out, ref, atol=1e-6, rtol=1e-6)

    print("KERNEL_OK")
</pallas_src>

<mosaic_0001>
module attributes {stable_mosaic.version = 11 : i64} {
  func.func @_se_gate_kernel(%arg0: i32, %arg1: memref<672x1xf32, #tpu.memory_space<vmem>>, %arg2: memref<672x196xf32, #tpu.memory_space<vmem>>, %arg3: memref<672x196xf32, #tpu.memory_space<vmem>>) attributes {dimension_semantics = [#tpu.dimension_semantics<parallel>], iteration_bounds = array<i64: 1>, scalar_prefetch = 0 : i64, scratch_operands = 0 : i64, tpu.core_type = #tpu.core_type<tc>, window_params = [{transform_indices = @transform_0, window_bounds = array<i64: 672, 1>}, {transform_indices = @transform_1, window_bounds = array<i64: 672, 196>}, {transform_indices = @transform_2, window_bounds = array<i64: 672, 196>}]} {
    %c0 = arith.constant 0 : index
    %c0_0 = arith.constant 0 : index
    %0 = vector.load %arg1[%c0, %c0_0] : memref<672x1xf32, #tpu.memory_space<vmem>>, vector<672x1xf32>
    %1 = arith.negf %0 : vector<672x1xf32>
    %2 = math.exp %1 : vector<672x1xf32>
    %cst = arith.constant 1.000000e+00 : f32
    %3 = vector.broadcast %cst : f32 to vector<672x1xf32>
    %4 = arith.addf %3, %2 : vector<672x1xf32>
    %5 = arith.divf %3, %4 : vector<672x1xf32>
    %c0_1 = arith.constant 0 : index
    %c0_2 = arith.constant 0 : index
    %6 = vector.load %arg2[%c0_1, %c0_2] : memref<672x196xf32, #tpu.memory_space<vmem>>, vector<672x196xf32>
    %7 = vector.broadcast %5 : vector<672x1xf32> to vector<672x196xf32>
    %8 = arith.mulf %7, %6 : vector<672x196xf32>
    %c0_3 = arith.constant 0 : index
    %c0_4 = arith.constant 0 : index
    %9 = vector.load %arg3[%c0_3, %c0_4] : memref<672x196xf32, #tpu.memory_space<vmem>>, vector<672x196xf32>
    tpu.vector_store %arg3[%c0_3, %c0_4], %8 {strides = array<i32>} : memref<672x196xf32, #tpu.memory_space<vmem>>, vector<672x196xf32>,
    return
  }
  func.func @transform_0(%arg0: i32) -> (i32, i32) {
    %c0_i32 = arith.constant 0 : i32
    %c0_i32_0 = arith.constant 0 : i32
    return %arg0, %c0_i32 : i32, i32
  }
  func.func @transform_1(%arg0: i32) -> (i32, i32) {
    %c0_i32 = arith.constant 0 : i32
    %c0_i32_0 = arith.constant 0 : i32
    return %arg0, %c0_i32 : i32, i32
  }
  func.func @transform_2(%arg0: i32) -> (i32, i32) {
    %c0_i32 = arith.constant 0 : i32
    %c0_i32_0 = arith.constant 0 : i32
    return %arg0, %c0_i32 : i32, i32
  }
}

</mosaic_0001>

<llo_original>
// kernel: tpu_custom_call.1
$region0: #{tpu_custom_call.1}
  #allocation0 [shape = 'u32[]', space=smem, size = 0x4, offset = 0x4, fixed_abs, tag = 'smem constant byte address 0x4 - core index']
  #allocation1 [shape = 'u32[144,128]{1,0:T(1,128)}', space=vmem, size = 0x12000, scoped, tag = 'internal scratch']
  %s0 = inlined_call_operand.vmem [shape: f32[672,1], index: 0, kind: input, shape index: {}]
  %s1 = inlined_call_operand.vmem [shape: f32[672,196], index: 1, kind: input, shape index: {}]
  %s2 = inlined_call_operand.vmem [shape: f32[672,196], index: 2, kind: output, shape index: {}]
  %s3 = sld [smem:[#allocation0]]
  $region18: #{tpu_custom_call.1} parent=0
    _
  %s5 = ssub.s32 1, %s3
  %s6 = scalar_select 0, %s5, %s3
  // Predicated region
  $region2: #{tpu_custom_call.1} parent=0 // pred_check
    _
  $region3: #{tpu_custom_call.1} parent=0 // pred_check_branch
    %8 = sbr.rel (0) target = $region5
  $region4: #{tpu_custom_call.1} parent=0 // pred_region
    _
  $region5: #{tpu_custom_call.1} parent=0 // pred_fallthru
    _
  // Predicated region
  $region6: #{tpu_custom_call.1} parent=0 // pred_check
    _
  $region7: #{tpu_custom_call.1} parent=0 // pred_check_branch
    %10 = sbr.rel (0) target = $region9
  $region8: #{tpu_custom_call.1} parent=0 // pred_region
    _
  $region9: #{tpu_custom_call.1} parent=0 // pred_fallthru
    _
  %v11 = vld [vmem:[%s0] sm:$0xff]
  %v12 = vld [vmem:[%s0 + $0x8] sm:$0xff]
  %v13 = vld [vmem:[%s0 + $0x10] sm:$0xff]
  %v14 = vld [vmem:[%s0 + $0x18] sm:$0xff]
  %v15 = vld [vmem:[%s0 + $0x20] sm:$0xff]
  %v16 = vld [vmem:[%s0 + $0x28] sm:$0xff]
  %v17 = vld [vmem:[%s0 + $0x30] sm:$0xff]
  %v18 = vld [vmem:[%s0 + $0x38] sm:$0xff]
  %v19 = vld [vmem:[%s0 + $0x40] sm:$0xff]
  %v20 = vld [vmem:[%s0 + $0x48] sm:$0xff]
  %v21 = vld [vmem:[%s0 + $0x50] sm:$0xff]
  %v22 = vld [vmem:[%s0 + $0x58] sm:$0xff]
  %v23 = vld [vmem:[%s0 + $0x60] sm:$0xff]
  %v24 = vld [vmem:[%s0 + $0x68] sm:$0xff]
  %v25 = vld [vmem:[%s0 + $0x70] sm:$0xff]
  %v26 = vld [vmem:[%s0 + $0x78] sm:$0xff]
  %v27 = vld [vmem:[%s0 + $0x80] sm:$0xff]
  %v28 = vld [vmem:[%s0 + $0x88] sm:$0xff]
  %v29 = vld [vmem:[%s0 + $0x90] sm:$0xff]
  %v30 = vld [vmem:[%s0 + $0x98] sm:$0xff]
  %v31 = vld [vmem:[%s0 + $0xa0] sm:$0xff]
  %v32 = vld [vmem:[%s0 + $0xa8] sm:$0xff]
  %v33 = vld [vmem:[%s0 + $0xb0] sm:$0xff]
  %v34 = vld [vmem:[%s0 + $0xb8] sm:$0xff]
  %v35 = vld [vmem:[%s0 + $0xc0] sm:$0xff]
  %v36 = vld [vmem:[%s0 + $0xc8] sm:$0xff]
  %v37 = vld [vmem:[%s0 + $0xd0] sm:$0xff]
  %v38 = vld [vmem:[%s0 + $0xd8] sm:$0xff]
  %v39 = vld [vmem:[%s0 + $0xe0] sm:$0xff]
  %v40 = vld [vmem:[%s0 + $0xe8] sm:$0xff]
  %v41 = vld [vmem:[%s0 + $0xf0] sm:$0xff]
  %v42 = vld [vmem:[%s0 + $0xf8] sm:$0xff]
  %v43 = vld [vmem:[%s0 + $0x100] sm:$0xff]
  %v44 = vld [vmem:[%s0 + $0x108] sm:$0xff]
  %v45 = vld [vmem:[%s0 + $0x110] sm:$0xff]
  %v46 = vld [vmem:[%s0 + $0x118] sm:$0xff]
  %v47 = vld [vmem:[%s0 + $0x120] sm:$0xff]
  %v48 = vld [vmem:[%s0 + $0x128] sm:$0xff]
  %v49 = vld [vmem:[%s0 + $0x130] sm:$0xff]
  %v50 = vld [vmem:[%s0 + $0x138] sm:$0xff]
  %v51 = vld [vmem:[%s0 + $0x140] sm:$0xff]
  %v52 = vld [vmem:[%s0 + $0x148] sm:$0xff]
  %v53 = vld [vmem:[%s0 + $0x150] sm:$0xff]
  %v54 = vld [vmem:[%s0 + $0x158] sm:$0xff]
  %v55 = vld [vmem:[%s0 + $0x160] sm:$0xff]
  %v56 = vld [vmem:[%s0 + $0x168] sm:$0xff]
  %v57 = vld [vmem:[%s0 + $0x170] sm:$0xff]
  %v58 = vld [vmem:[%s0 + $0x178] sm:$0xff]
  %v59 = vld [vmem:[%s0 + $0x180] sm:$0xff]
  %v60 = vld [vmem:[%s0 + $0x188] sm:$0xff]
  %v61 = vld [vmem:[%s0 + $0x190] sm:$0xff]
  %v62 = vld [vmem:[%s0 + $0x198] sm:$0xff]
  %v63 = vld [vmem:[%s0 + $0x1a0] sm:$0xff]
  %v64 = vld [vmem:[%s0 + $0x1a8] sm:$0xff]
  %v65 = vld [vmem:[%s0 + $0x1b0] sm:$0xff]
  %v66 = vld [vmem:[%s0 + $0x1b8] sm:$0xff]
  %v67 = vld [vmem:[%s0 + $0x1c0] sm:$0xff]
  %v68 = vld [vmem:[%s0 + $0x1c8] sm:$0xff]
  %v69 = vld [vmem:[%s0 + $0x1d0] sm:$0xff]
  %v70 = vld [vmem:[%s0 + $0x1d8] sm:$0xff]
  %v71 = vld [vmem:[%s0 + $0x1e0] sm:$0xff]
  %v72 = vld [vmem:[%s0 + $0x1e8] sm:$0xff]
  %v73 = vld [vmem:[%s0 + $0x1f0] sm:$0xff]
  %v74 = vld [vmem:[%s0 + $0x1f8] sm:$0xff]
  %v75 = vld [vmem:[%s0 + $0x200] sm:$0xff]
  %v76 = vld [vmem:[%s0 + $0x208] sm:$0xff]
  %v77 = vld [vmem:[%s0 + $0x210] sm:$0xff]
  %v78 = vld [vmem:[%s0 + $0x218] sm:$0xff]
  %v79 = vld [vmem:[%s0 + $0x220] sm:$0xff]
  %v80 = vld [vmem:[%s0 + $0x228] sm:$0xff]
  %v81 = vld [vmem:[%s0 + $0x230] sm:$0xff]
  %v82 = vld [vmem:[%s0 + $0x238] sm:$0xff]
  %v83 = vld [vmem:[%s0 + $0x240] sm:$0xff]
  %v84 = vld [vmem:[%s0 + $0x248] sm:$0xff]
  %v85 = vld [vmem:[%s0 + $0x250] sm:$0xff]
  %v86 = vld [vmem:[%s0 + $0x258] sm:$0xff]
  %v87 = vld [vmem:[%s0 + $0x260] sm:$0xff]
  %v88 = vld [vmem:[%s0 + $0x268] sm:$0xff]
  %v89 = vld [vmem:[%s0 + $0x270] sm:$0xff]
  %v90 = vld [vmem:[%s0 + $0x278] sm:$0xff]
  %v91 = vld [vmem:[%s0 + $0x280] sm:$0xff]
  %v92 = vld [vmem:[%s0 + $0x288] sm:$0xff]
  %v93 = vld [vmem:[%s0 + $0x290] sm:$0xff]
  %v94 = vld [vmem:[%s0 + $0x298] sm:$0xff]
  %v95 = vxor.u32 %v11, 2147483648
  %v96 = vxor.u32 %v12, 2147483648
  %v97 = vxor.u32 %v13, 2147483648
  %v98 = vxor.u32 %v14, 2147483648
  %v99 = vxor.u32 %v15, 2147483648
  %v100 = vxor.u32 %v16, 2147483648
  %v101 = vxor.u32 %v17, 2147483648
  %v102 = vxor.u32 %v18, 2147483648
  %v103 = vxor.u32 %v19, 2147483648
  %v104 = vxor.u32 %v20, 2147483648
  %v105 = vxor.u32 %v21, 2147483648
  %v106 = vxor.u32 %v22, 2147483648
  %v107 = vxor.u32 %v23, 2147483648
  %v108 = vxor.u32 %v24, 2147483648
  %v109 = vxor.u32 %v25, 2147483648
  %v110 = vxor.u32 %v26, 2147483648
  %v111 = vxor.u32 %v27, 2147483648
  %v112 = vxor.u32 %v28, 2147483648
  %v113 = vxor.u32 %v29, 2147483648
  %v114 = vxor.u32 %v30, 2147483648
  %v115 = vxor.u32 %v31, 2147483648
  %v116 = vxor.u32 %v32, 2147483648
  %v117 = vxor.u32 %v33, 2147483648
  %v118 = vxor.u32 %v34, 2147483648
  %v119 = vxor.u32 %v35, 2147483648
  %v120 = vxor.u32 %v36, 2147483648
  %v121 = vxor.u32 %v37, 2147483648
  %v122 = vxor.u32 %v38, 2147483648
  %v123 = vxor.u32 %v39, 2147483648
  %v124 = vxor.u32 %v40, 2147483648
  %v125 = vxor.u32 %v41, 2147483648
  %v126 = vxor.u32 %v42, 2147483648
  %v127 = vxor.u32 %v43, 2147483648
  %v128 = vxor.u32 %v44, 2147483648
  %v129 = vxor.u32 %v45, 2147483648
  %v130 = vxor.u32 %v46, 2147483648
  %v131 = vxor.u32 %v47, 2147483648
  %v132 = vxor.u32 %v48, 2147483648
  %v133 = vxor.u32 %v49, 2147483648
  %v134 = vxor.u32 %v50, 2147483648
  %v135 = vxor.u32 %v51, 2147483648
  %v136 = vxor.u32 %v52, 2147483648
  %v137 = vxor.u32 %v53, 2147483648
  %v138 = vxor.u32 %v54, 2147483648
  %v139 = vxor.u32 %v55, 2147483648
  %v140 = vxor.u32 %v56, 2147483648
  %v141 = vxor.u32 %v57, 2147483648
  %v142 = vxor.u32 %v58, 2147483648
  %v143 = vxor.u32 %v59, 2147483648
  %v144 = vxor.u32 %v60, 2147483648
  %v145 = vxor.u32 %v61, 2147483648
  %v146 = vxor.u32 %v62, 2147483648
  %v147 = vxor.u32 %v63, 2147483648
  %v148 = vxor.u32 %v64, 2147483648
  %v149 = vxor.u32 %v65, 2147483648
  %v150 = vxor.u32 %v66, 2147483648
  %v151 = vxor.u32 %v67, 2147483648
  %v152 = vxor.u32 %v68, 2147483648
  %v153 = vxor.u32 %v69, 2147483648
  %v154 = vxor.u32 %v70, 2147483648
  %v155 = vxor.u32 %v71, 2147483648
  %v156 = vxor.u32 %v72, 2147483648
  %v157 = vxor.u32 %v73, 2147483648
  %v158 = vxor.u32 %v74, 2147483648
  %v159 = vxor.u32 %v75, 2147483648
  %v160 = vxor.u32 %v76, 2147483648
  %v161 = vxor.u32 %v77, 2147483648
  %v162 = vxor.u32 %v78, 2147483648
  %v163 = vxor.u32 %v79, 2147483648
  %v164 = vxor.u32 %v80, 2147483648
  %v165 = vxor.u32 %v81, 2147483648
  %v166 = vxor.u32 %v82, 2147483648
  %v167 = vxor.u32 %v83, 2147483648
  %v168 = vxor.u32 %v84, 2147483648
  %v169 = vxor.u32 %v85, 2147483648
  %v170 = vxor.u32 %v86, 2147483648
  %v171 = vxor.u32 %v87, 2147483648
  %v172 = vxor.u32 %v88, 2147483648
  %v173 = vxor.u32 %v89, 2147483648
  %v174 = vxor.u32 %v90, 2147483648
  %v175 = vxor.u32 %v91, 2147483648
  %v176 = vxor.u32 %v92, 2147483648
  %v177 = vxor.u32 %v93, 2147483648
  %v178 = vxor.u32 %v94, 2147483648
  %v179 = vmul.f32 %v95, 1.442695
  %v180 = vpow.pop %v179
  %v181 = vmul.f32 %v96, 1.442695
  %v182 = vpow.pop %v181
  %v183 = vmul.f32 %v97, 1.442695
  %v184 = vpow.pop %v183
  %v185 = vmul.f32 %v98, 1.442695
  %v186 = vpow.pop %v185
  %v187 = vmul.f32 %v99, 1.442695
  %v188 = vpow.pop %v187
  %v189 = vmul.f32 %v100, 1.442695
  %v190 = vpow.pop %v189
  %v191 = vmul.f32 %v101, 1.442695
  %v192 = vpow.pop %v191
  %v193 = vmul.f32 %v102, 1.442695
  %v194 = vpow.pop %v193
  %v195 = vmul.f32 %v103, 1.442695
  %v196 = vpow.pop %v195
  %v197 = vmul.f32 %v104, 1.442695
  %v198 = vpow.pop %v197
  %v199 = vmul.f32 %v105, 1.442695
  %v200 = vpow.pop %v199
  %v201 = vmul.f32 %v106, 1.442695
  %v202 = vpow.pop %v201
  %v203 = vmul.f32 %v107, 1.442695
  %v204 = vpow.pop %v203
  %v205 = vmul.f32 %v108, 1.442695
  %v206 = vpow.pop %v205
  %v207 = vmul.f32 %v109, 1.442695
  %v208 = vpow.pop %v207
  %v209 = vmul.f32 %v110, 1.442695
  %v210 = vpow.pop %v209
  %v211 = vmul.f32 %v111, 1.442695
  %v212 = vpow.pop %v211
  %v213 = vmul.f32 %v112, 1.442695
  %v214 = vpow.pop %v213
  %v215 = vmul.f32 %v113, 1.442695
  %v216 = vpow.pop %v215
  %v217 = vmul.f32 %v114, 1.442695
  %v218 = vpow.pop %v217
  %v219 = vmul.f32 %v115, 1.442695
  %v220 = vpow.pop %v219
  %v221 = vmul.f32 %v116, 1.442695
  %v222 = vpow.pop %v221
  %v223 = vmul.f32 %v117, 1.442695
  %v224 = vpow.pop %v223
  %v225 = vmul.f32 %v118, 1.442695
  %v226 = vpow.pop %v225
  %v227 = vmul.f32 %v119, 1.442695
  %v228 = vpow.pop %v227
  %v229 = vmul.f32 %v120, 1.442695
  %v230 = vpow.pop %v229
  %v231 = vmul.f32 %v121, 1.442695
  %v232 = vpow.pop %v231
  %v233 = vmul.f32 %v122, 1.442695
  %v234 = vpow.pop %v233
  %v235 = vmul.f32 %v123, 1.442695
  %v236 = vpow.pop %v235
  %v237 = vmul.f32 %v124, 1.442695
  %v238 = vpow.pop %v237
  %v239 = vmul.f32 %v125, 1.442695
  %v240 = vpow.pop %v239
  %v241 = vmul.f32 %v126, 1.442695
  %v242 = vpow.pop %v241
  %v243 = vmul.f32 %v127, 1.442695
  %v244 = vpow.pop %v243
  %v245 = vmul.f32 %v128, 1.442695
  %v246 = vpow.pop %v245
  %v247 = vmul.f32 %v129, 1.442695
  %v248 = vpow.pop %v247
  %v249 = vmul.f32 %v130, 1.442695
  %v250 = vpow.pop %v249
  %v251 = vmul.f32 %v131, 1.442695
  %v252 = vpow.pop %v251
  %v253 = vmul.f32 %v132, 1.442695
  %v254 = vpow.pop %v253
  %v255 = vmul.f32 %v133, 1.442695
  %v256 = vpow.pop %v255
  %v257 = vmul.f32 %v134, 1.442695
  %v258 = vpow.pop %v257
  %v259 = vmul.f32 %v135, 1.442695
  %v260 = vpow.pop %v259
  %v261 = vmul.f32 %v136, 1.442695
  %v262 = vpow.pop %v261
  %v263 = vmul.f32 %v137, 1.442695
  %v264 = vpow.pop %v263
  %v265 = vmul.f32 %v138, 1.442695
  %v266 = vpow.pop %v265
  %v267 = vmul.f32 %v139, 1.442695
  %v268 = vpow.pop %v267
  %v269 = vmul.f32 %v140, 1.442695
  %v270 = vpow.pop %v269
  %v271 = vmul.f32 %v141, 1.442695
  %v272 = vpow.pop %v271
  %v273 = vmul.f32 %v142, 1.442695
  %v274 = vpow.pop %v273
  %v275 = vmul.f32 %v143, 1.442695
  %v276 = vpow.pop %v275
  %v277 = vmul.f32 %v144, 1.442695
  %v278 = vpow.pop %v277
  %v279 = vmul.f32 %v145, 1.442695
  %v280 = vpow.pop %v279
  %v281 = vmul.f32 %v146, 1.442695
  %v282 = vpow.pop %v281
  %v283 = vmul.f32 %v147, 1.442695
  %v284 = vpow.pop %v283
  %v285 = vmul.f32 %v148, 1.442695
  %v286 = vpow.pop %v285
  %v287 = vmul.f32 %v149, 1.442695
  %v288 = vpow.pop %v287
  %v289 = vmul.f32 %v150, 1.442695
  %v290 = vpow.pop %v289
  %v291 = vmul.f32 %v151, 1.442695
  %v292 = vpow.pop %v291
  %v293 = vmul.f32 %v152, 1.442695
  %v294 = vpow.pop %v293
  %v295 = vmul.f32 %v153, 1.442695
  %v296 = vpow.pop %v295
  %v297 = vmul.f32 %v154, 1.442695
  %v298 = vpow.pop %v297
  %v299 = vmul.f32 %v155, 1.442695
  %v300 = vpow.pop %v299
  %v301 = vmul.f32 %v156, 1.442695
  %v302 = vpow.pop %v301
  %v303 = vmul.f32 %v157, 1.442695
  %v304 = vpow.pop %v303
  %v305 = vmul.f32 %v158, 1.442695
  %v306 = vpow.pop %v305
  %v307 = vmul.f32 %v159, 1.442695
  %v308 = vpow.pop %v307
  %v309 = vmul.f32 %v160, 1.442695
  %v310 = vpow.pop %v309
  %v311 = vmul.f32 %v161, 1.442695
  %v312 = vpow.pop %v311
  %v313 = vmul.f32 %v162, 1.442695
  %v314 = vpow.pop %v313
  %v315 = vmul.f32 %v163, 1.442695
  %v316 = vpow.pop %v315
  %v317 = vmul.f32 %v164, 1.442695
  %v318 = vpow.pop %v317
  %v319 = vmul.f32 %v165, 1.442695
  %v320 = vpow.pop %v319
  %v321 = vmul.f32 %v166, 1.442695
  %v322 = vpow.pop %v321
  %v323 = vmul.f32 %v167, 1.442695
  %v324 = vpow.pop %v323
  %v325 = vmul.f32 %v168, 1.442695
  %v326 = vpow.pop %v325
  %v327 = vmul.f32 %v169, 1.442695
  %v328 = vpow.pop %v327
  %v329 = vmul.f32 %v170, 1.442695
  %v330 = vpow.pop %v329
  %v331 = vmul.f32 %v171, 1.442695
  %v332 = vpow.pop %v331
  %v333 = vmul.f32 %v172, 1.442695
  %v334 = vpow.pop %v333
  %v335 = vmul.f32 %v173, 1.442695
  %v336 = vpow.pop %v335
  %v337 = vmul.f32 %v174, 1.442695
  %v338 = vpow.pop %v337
  %v339 = vmul.f32 %v175, 1.442695
  %v340 = vpow.pop %v339
  %v341 = vmul.f32 %v176, 1.442695
  %v342 = vpow.pop %v341
  %v343 = vmul.f32 %v177, 1.442695
  %v344 = vpow.pop %v343
  %v345 = vmul.f32 %v178, 1.442695
  %v346 = vpow.pop %v345
  %v347 = vadd.f32 %v180, 1.0
  %v348 = vadd.f32 %v182, 1.0
  %v349 = vadd.f32 %v184, 1.0
  %v350 = vadd.f32 %v186, 1.0
  %v351 = vadd.f32 %v188, 1.0
  %v352 = vadd.f32 %v190, 1.0
  %v353 = vadd.f32 %v192, 1.0
  %v354 = vadd.f32 %v194, 1.0
  %v355 = vadd.f32 %v196, 1.0
  %v356 = vadd.f32 %v198, 1.0
  %v357 = vadd.f32 %v200, 1.0
  %v358 = vadd.f32 %v202, 1.0
  %v359 = vadd.f32 %v204, 1.0
  %v360 = vadd.f32 %v206, 1.0
  %v361 = vadd.f32 %v208, 1.0
  %v362 = vadd.f32 %v210, 1.0
  %v363 = vadd.f32 %v212, 1.0
  %v364 = vadd.f32 %v214, 1.0
  %v365 = vadd.f32 %v216, 1.0
  %v366 = vadd.f32 %v218, 1.0
  %v367 = vadd.f32 %v220, 1.0
  %v368 = vadd.f32 %v222, 1.0
  %v369 = vadd.f32 %v224, 1.0
  %v370 = vadd.f32 %v226, 1.0
  %v371 = vadd.f32 %v228, 1.0
  %v372 = vadd.f32 %v230, 1.0
  %v373 = vadd.f32 %v232, 1.0
  %v374 = vadd.f32 %v234, 1.0
  %v375 = vadd.f32 %v236, 1.0
  %v376 = vadd.f32 %v238, 1.0
  %v377 = vadd.f32 %v240, 1.0
  %v378 = vadd.f32 %v242, 1.0
  %v379 = vadd.f32 %v244, 1.0
  %v380 = vadd.f32 %v246, 1.0
  %v381 = vadd.f32 %v248, 1.0
  %v382 = vadd.f32 %v250, 1.0
  %v383 = vadd.f32 %v252, 1.0
  %v384 = vadd.f32 %v254, 1.0
  %v385 = vadd.f32 %v256, 1.0
  %v386 = vadd.f32 %v258, 1.0
  %v387 = vadd.f32 %v260, 1.0
  %v388 = vadd.f32 %v262, 1.0
  %v389 = vadd.f32 %v264, 1.0
  %v390 = vadd.f32 %v266, 1.0
  %v391 = vadd.f32 %v268, 1.0
  %v392 = vadd.f32 %v270, 1.0
  %v393 = vadd.f32 %v272, 1.0
  %v394 = vadd.f32 %v274, 1.0
  %v395 = vadd.f32 %v276, 1.0
  %v396 = vadd.f32 %v278, 1.0
  %v397 = vadd.f32 %v280, 1.0
  %v398 = vadd.f32 %v282, 1.0
  %v399 = vadd.f32 %v284, 1.0
  %v400 = vadd.f32 %v286, 1.0
  %v401 = vadd.f32 %v288, 1.0
  %v402 = vadd.f32 %v290, 1.0
  %v403 = vadd.f32 %v292, 1.0
  %v404 = vadd.f32 %v294, 1.0
  %v405 = vadd.f32 %v296, 1.0
  %v406 = vadd.f32 %v298, 1.0
  %v407 = vadd.f32 %v300, 1.0
  %v408 = vadd.f32 %v302, 1.0
  %v409 = vadd.f32 %v304, 1.0
  %v410 = vadd.f32 %v306, 1.0
  %v411 = vadd.f32 %v308, 1.0
  %v412 = vadd.f32 %v310, 1.0
  %v413 = vadd.f32 %v312, 1.0
  %v414 = vadd.f32 %v314, 1.0
  %v415 = vadd.f32 %v316, 1.0
  %v416 = vadd.f32 %v318, 1.0
  %v417 = vadd.f32 %v320, 1.0
  %v418 = vadd.f32 %v322, 1.0
  %v419 = vadd.f32 %v324, 1.0
  %v420 = vadd.f32 %v326, 1.0
  %v421 = vadd.f32 %v328, 1.0
  %v422 = vadd.f32 %v330, 1.0
  %v423 = vadd.f32 %v332, 1.0
  %v424 = vadd.f32 %v334, 1.0
  %v425 = vadd.f32 %v336, 1.0
  %v426 = vadd.f32 %v338, 1.0
  %v427 = vadd.f32 %v340, 1.0
  %v428 = vadd.f32 %v342, 1.0
  %v429 = vadd.f32 %v344, 1.0
  %v430 = vadd.f32 %v346, 1.0
  %v431 = vrcp.pop %v347
  %v432 = vmul.f32 1.0, %v431
  %v433 = vrcp.pop %v348
  %v434 = vmul.f32 1.0, %v433
  %v435 = vrcp.pop %v349
  %v436 = vmul.f32 1.0, %v435
  %v437 = vrcp.pop %v350
  %v438 = vmul.f32 1.0, %v437
  %v439 = vrcp.pop %v351
  %v440 = vmul.f32 1.0, %v439
  %v441 = vrcp.pop %v352
  %v442 = vmul.f32 1.0, %v441
  %v443 = vrcp.pop %v353
  %v444 = vmul.f32 1.0, %v443
  %v445 = vrcp.pop %v354
  %v446 = vmul.f32 1.0, %v445
  %v447 = vrcp.pop %v355
  %v448 = vmul.f32 1.0, %v447
  %v449 = vrcp.pop %v356
  %v450 = vmul.f32 1.0, %v449
  %v451 = vrcp.pop %v357
  %v452 = vmul.f32 1.0, %v451
  %v453 = vrcp.pop %v358
  %v454 = vmul.f32 1.0, %v453
  %v455 = vrcp.pop %v359
  %v456 = vmul.f32 1.0, %v455
  %v457 = vrcp.pop %v360
  %v458 = vmul.f32 1.0, %v457
  %v459 = vrcp.pop %v361
  %v460 = vmul.f32 1.0, %v459
  %v461 = vrcp.pop %v362
  %v462 = vmul.f32 1.0, %v461
  %v463 = vrcp.pop %v363
  %v464 = vmul.f32 1.0, %v463
  %v465 = vrcp.pop %v364
  %v466 = vmul.f32 1.0, %v465
  %v467 = vrcp.pop %v365
  %v468 = vmul.f32 1.0, %v467
  %v469 = vrcp.pop %v366
  %v470 = vmul.f32 1.0, %v469
  %v471 = vrcp.pop %v367
  %v472 = vmul.f32 1.0, %v471
  %v473 = vrcp.pop %v368
  %v474 = vmul.f32 1.0, %v473
  %v475 = vrcp.pop %v369
  %v476 = vmul.f32 1.0, %v475
  %v477 = vrcp.pop %v370
  %v478 = vmul.f32 1.0, %v477
  %v479 = vrcp.pop %v371
  %v480 = vmul.f32 1.0, %v479
  %v481 = vrcp.pop %v372
  %v482 = vmul.f32 1.0, %v481
  %v483 = vrcp.pop %v373
  %v484 = vmul.f32 1.0, %v483
  %v485 = vrcp.pop %v374
  %v486 = vmul.f32 1.0, %v485
  %v487 = vrcp.pop %v375
  %v488 = vmul.f32 1.0, %v487
  %v489 = vrcp.pop %v376
  %v490 = vmul.f32 1.0, %v489
  %v491 = vrcp.pop %v377
  %v492 = vmul.f32 1.0, %v491
  %v493 = vrcp.pop %v378
  %v494 = vmul.f32 1.0, %v493
  %v495 = vrcp.pop %v379
  %v496 = vmul.f32 1.0, %v495
  %v497 = vrcp.pop %v380
  %v498 = vmul.f32 1.0, %v497
  %v499 = vrcp.pop %v381
  %v500 = vmul.f32 1.0, %v499
  %v501 = vrcp.pop %v382
  %v502 = vmul.f32 1.0, %v501
  %v503 = vrcp.pop %v383
  %v504 = vmul.f32 1.0, %v503
  %v505 = vrcp.pop %v384
  %v506 = vmul.f32 1.0, %v505
  %v507 = vrcp.pop %v385
  %v508 = vmul.f32 1.0, %v507
  %v509 = vrcp.pop %v386
  %v510 = vmul.f32 1.0, %v509
  %v511 = vrcp.pop %v387
  %v512 = vmul.f32 1.0, %v511
  %v513 = vrcp.pop %v388
  %v514 = vmul.f32 1.0, %v513
  %v515 = vrcp.pop %v389
  %v516 = vmul.f32 1.0, %v515
  %v517 = vrcp.pop %v390
  %v518 = vmul.f32 1.0, %v517
  %v519 = vrcp.pop %v391
  %v520 = vmul.f32 1.0, %v519
  %v521 = vrcp.pop %v392
  %v522 = vmul.f32 1.0, %v521
  %v523 = vrcp.pop %v393
  %v524 = vmul.f32 1.0, %v523
  %v525 = vrcp.pop %v394
  %v526 = vmul.f32 1.0, %v525
  %v527 = vrcp.pop %v395
  %v528 = vmul.f32 1.0, %v527
  %v529 = vrcp.pop %v396
  %v530 = vmul.f32 1.0, %v529
  %v531 = vrcp.pop %v397
  %v532 = vmul.f32 1.0, %v531
  %v533 = vrcp.pop %v398
  %v534 = vmul.f32 1.0, %v533
  %v535 = vrcp.pop %v399
  %v536 = vmul.f32 1.0, %v535
  %v537 = vrcp.pop %v400
  %v538 = vmul.f32 1.0, %v537
  %v539 = vrcp.pop %v401
  %v540 = vmul.f32 1.0, %v539
  %v541 = vrcp.pop %v402
  %v542 = vmul.f32 1.0, %v541
  %v543 = vrcp.pop %v403
  %v544 = vmul.f32 1.0, %v543
  %v545 = vrcp.pop %v404
  %v546 = vmul.f32 1.0, %v545
  %v547 = vrcp.pop %v405
  %v548 = vmul.f32 1.0, %v547
  %v549 = vrcp.pop %v406
  %v550 = vmul.f32 1.0, %v549
  %v551 = vrcp.pop %v407
  %v552 = vmul.f32 1.0, %v551
  %v553 = vrcp.pop %v408
  %v554 = vmul.f32 1.0, %v553
  %v555 = vrcp.pop %v409
  %v556 = vmul.f32 1.0, %v555
  %v557 = vrcp.pop %v410
  %v558 = vmul.f32 1.0, %v557
  %v559 = vrcp.pop %v411
  %v560 = vmul.f32 1.0, %v559
  %v561 = vrcp.pop %v412
  %v562 = vmul.f32 1.0, %v561
  %v563 = vrcp.pop %v413
  %v564 = vmul.f32 1.0, %v563
  %v565 = vrcp.pop %v414
  %v566 = vmul.f32 1.0, %v565
  %v567 = vrcp.pop %v415
  %v568 = vmul.f32 1.0, %v567
  %v569 = vrcp.pop %v416
  %v570 = vmul.f32 1.0, %v569
  %v571 = vrcp.pop %v417
  %v572 = vmul.f32 1.0, %v571
  %v573 = vrcp.pop %v418
  %v574 = vmul.f32 1.0, %v573
  %v575 = vrcp.pop %v419
  %v576 = vmul.f32 1.0, %v575
  %v577 = vrcp.pop %v420
  %v578 = vmul.f32 1.0, %v577
  %v579 = vrcp.pop %v421
  %v580 = vmul.f32 1.0, %v579
  %v581 = vrcp.pop %v422
  %v582 = vmul.f32 1.0, %v581
  %v583 = vrcp.pop %v423
  %v584 = vmul.f32 1.0, %v583
  %v585 = vrcp.pop %v424
  %v586 = vmul.f32 1.0, %v585
  %v587 = vrcp.pop %v425
  %v588 = vmul.f32 1.0, %v587
  %v589 = vrcp.pop %v426
  %v590 = vmul.f32 1.0, %v589
  %v591 = vrcp.pop %v427
  %v592 = vmul.f32 1.0, %v591
  %v593 = vrcp.pop %v428
  %v594 = vmul.f32 1.0, %v593
  %v595 = vrcp.pop %v429
  %v596 = vmul.f32 1.0, %v595
  %v597 = vrcp.pop %v430
  %v598 = vmul.f32 1.0, %v597
  %v599 = vld [vmem:[%s1] sm:$0xff]
  %v600 = vld [vmem:[%s1 + $0x8] sm:$0xff]
  %v601 = vld [vmem:[%s1 + $0x10] sm:$0xff]
  %v602 = vld [vmem:[%s1 + $0x18] sm:$0xff]
  %v603 = vld [vmem:[%s1 + $0x20] sm:$0xff]
  %v604 = vld [vmem:[%s1 + $0x28] sm:$0xff]
  %v605 = vld [vmem:[%s1 + $0x30] sm:$0xff]
  %v606 = vld [vmem:[%s1 + $0x38] sm:$0xff]
  %v607 = vld [vmem:[%s1 + $0x40] sm:$0xff]
  %v608 = vld [vmem:[%s1 + $0x48] sm:$0xff]
  %v609 = vld [vmem:[%s1 + $0x50] sm:$0xff]
  %v610 = vld [vmem:[%s1 + $0x58] sm:$0xff]
  %v611 = vld [vmem:[%s1 + $0x60] sm:$0xff]
  %v612 = vld [vmem:[%s1 + $0x68] sm:$0xff]
  %v613 = vld [vmem:[%s1 + $0x70] sm:$0xff]
  %v614 = vld [vmem:[%s1 + $0x78] sm:$0xff]
  %v615 = vld [vmem:[%s1 + $0x80] sm:$0xff]
  %v616 = vld [vmem:[%s1 + $0x88] sm:$0xff]
  %v617 = vld [vmem:[%s1 + $0x90] sm:$0xff]
  %v618 = vld [vmem:[%s1 + $0x98] sm:$0xff]
  %v619 = vld [vmem:[%s1 + $0xa0] sm:$0xff]
  %v620 = vld [vmem:[%s1 + $0xa8] sm:$0xff]
  %v621 = vld [vmem:[%s1 + $0xb0] sm:$0xff]
  %v622 = vld [vmem:[%s1 + $0xb8] sm:$0xff]
  %v623 = vld [vmem:[%s1 + $0xc0] sm:$0xff]
  %v624 = vld [vmem:[%s1 + $0xc8] sm:$0xff]
  %v625 = vld [vmem:[%s1 + $0xd0] sm:$0xff]
  %v626 = vld [vmem:[%s1 + $0xd8] sm:$0xff]
  %v627 = vld [vmem:[%s1 + $0xe0] sm:$0xff]
  %v628 = vld [vmem:[%s1 + $0xe8] sm:$0xff]
  %v629 = vld [vmem:[%s1 + $0xf0] sm:$0xff]
  %v630 = vld [vmem:[%s1 + $0xf8] sm:$0xff]
  %v631 = vld [vmem:[%s1 + $0x100] sm:$0xff]
  %v632 = vld [vmem:[%s1 + $0x108] sm:$0xff]
  %v633 = vld [vmem:[%s1 + $0x110] sm:$0xff]
  %v634 = vld [vmem:[%s1 + $0x118] sm:$0xff]
  %v635 = vld [vmem:[%s1 + $0x120] sm:$0xff]
  %v636 = vld [vmem:[%s1 + $0x128] sm:$0xff]
  %v637 = vld [vmem:[%s1 + $0x130] sm:$0xff]
  %v638 = vld [vmem:[%s1 + $0x138] sm:$0xff]
  %v639 = vld [vmem:[%s1 + $0x140] sm:$0xff]
  %v640 = vld [vmem:[%s1 + $0x148] sm:$0xff]
  %v641 = vld [vmem:[%s1 + $0x150] sm:$0xff]
  %v642 = vld [vmem:[%s1 + $0x158] sm:$0xff]
  %v643 = vld [vmem:[%s1 + $0x160] sm:$0xff]
  %v644 = vld [vmem:[%s1 + $0x168] sm:$0xff]
  %v645 = vld [vmem:[%s1 + $0x170] sm:$0xff]
  %v646 = vld [vmem:[%s1 + $0x178] sm:$0xff]
  %v647 = vld [vmem:[%s1 + $0x180] sm:$0xff]
  %v648 = vld [vmem:[%s1 + $0x188] sm:$0xff]
  %v649 = vld [vmem:[%s1 + $0x190] sm:$0xff]
  %v650 = vld [vmem:[%s1 + $0x198] sm:$0xff]
  %v651 = vld [vmem:[%s1 + $0x1a0] sm:$0xff]
  %v652 = vld [vmem:[%s1 + $0x1a8] sm:$0xff]
  %v653 = vld [vmem:[%s1 + $0x1b0] sm:$0xff]
  %v654 = vld [vmem:[%s1 + $0x1b8] sm:$0xff]
  %v655 = vld [vmem:[%s1 + $0x1c0] sm:$0xff]
  %v656 = vld [vmem:[%s1 + $0x1c8] sm:$0xff]
  %v657 = vld [vmem:[%s1 + $0x1d0] sm:$0xff]
  %v658 = vld [vmem:[%s1 + $0x1d8] sm:$0xff]
  %v659 = vld [vmem:[%s1 + $0x1e0] sm:$0xff]
  %v660 = vld [vmem:[%s1 + $0x1e8] sm:$0xff]
  %v661 = vld [vmem:[%s1 + $0x1f0] sm:$0xff]
  %v662 = vld [vmem:[%s1 + $0x1f8] sm:$0xff]
  %v663 = vld [vmem:[%s1 + $0x200] sm:$0xff]
  %v664 = vld [vmem:[%s1 + $0x208] sm:$0xff]
  %v665 = vld [vmem:[%s1 + $0x210] sm:$0xff]
  %v666 = vld [vmem:[%s1 + $0x218] sm:$0xff]
  %v667 = vld [vmem:[%s1 + $0x220] sm:$0xff]
  %v668 = vld [vmem:[%s1 + $0x228] sm:$0xff]
  %v669 = vld [vmem:[%s1 + $0x230] sm:$0xff]
  %v670 = vld [vmem:[%s1 + $0x238] sm:$0xff]
  %v671 = vld [vmem:[%s1 + $0x240] sm:$0xff]
  %v672 = vld [vmem:[%s1 + $0x248] sm:$0xff]
  %v673 = vld [vmem:[%s1 + $0x250] sm:$0xff]
  %v674 = vld [vmem:[%s1 + $0x258] sm:$0xff]
  %v675 = vld [vmem:[%s1 + $0x260] sm:$0xff]
  %v676 = vld [vmem:[%s1 + $0x268] sm:$0xff]
  %v677 = vld [vmem:[%s1 + $0x270] sm:$0xff]
  %v678 = vld [vmem:[%s1 + $0x278] sm:$0xff]
  %v679 = vld [vmem:[%s1 + $0x280] sm:$0xff]
  %v680 = vld [vmem:[%s1 + $0x288] sm:$0xff]
  %v681 = vld [vmem:[%s1 + $0x290] sm:$0xff]
  %v682 = vld [vmem:[%s1 + $0x298] sm:$0xff]
  %v683 = vld [vmem:[%s1 + $0x2a0] sm:$0xff]
  %v684 = vld [vmem:[%s1 + $0x2a8] sm:$0xff]
  %v685 = vld [vmem:[%s1 + $0x2b0] sm:$0xff]
  %v686 = vld [vmem:[%s1 + $0x2b8] sm:$0xff]
  %v687 = vld [vmem:[%s1 + $0x2c0] sm:$0xff]
  %v688 = vld [vmem:[%s1 + $0x2c8] sm:$0xff]
  %v689 = vld [vmem:[%s1 + $0x2d0] sm:$0xff]
  %v690 = vld [vmem:[%s1 + $0x2d8] sm:$0xff]
  %v691 = vld [vmem:[%s1 + $0x2e0] sm:$0xff]
  %v692 = vld [vmem:[%s1 + $0x2e8] sm:$0xff]
  %v693 = vld [vmem:[%s1 + $0x2f0] sm:$0xff]
  %v694 = vld [vmem:[%s1 + $0x2f8] sm:$0xff]
  %v695 = vld [vmem:[%s1 + $0x300] sm:$0xff]
  %v696 = vld [vmem:[%s1 + $0x308] sm:$0xff]
  %v697 = vld [vmem:[%s1 + $0x310] sm:$0xff]
  %v698 = vld [vmem:[%s1 + $0x318] sm:$0xff]
  %v699 = vld [vmem:[%s1 + $0x320] sm:$0xff]
  %v700 = vld [vmem:[%s1 + $0x328] sm:$0xff]
  %v701 = vld [vmem:[%s1 + $0x330] sm:$0xff]
  %v702 = vld [vmem:[%s1 + $0x338] sm:$0xff]
  %v703 = vld [vmem:[%s1 + $0x340] sm:$0xff]
  %v704 = vld [vmem:[%s1 + $0x348] sm:$0xff]
  %v705 = vld [vmem:[%s1 + $0x350] sm:$0xff]
  %v706 = vld [vmem:[%s1 + $0x358] sm:$0xff]
  %v707 = vld [vmem:[%s1 + $0x360] sm:$0xff]
  %v708 = vld [vmem:[%s1 + $0x368] sm:$0xff]
  %v709 = vld [vmem:[%s1 + $0x370] sm:$0xff]
  %v710 = vld [vmem:[%s1 + $0x378] sm:$0xff]
  %v711 = vld [vmem:[%s1 + $0x380] sm:$0xff]
  %v712 = vld [vmem:[%s1 + $0x388] sm:$0xff]
  %v713 = vld [vmem:[%s1 + $0x390] sm:$0xff]
  %v714 = vld [vmem:[%s1 + $0x398] sm:$0xff]
  %v715 = vld [vmem:[%s1 + $0x3a0] sm:$0xff]
  %v716 = vld [vmem:[%s1 + $0x3a8] sm:$0xff]
  %v717 = vld [vmem:[%s1 + $0x3b0] sm:$0xff]
  %v718 = vld [vmem:[%s1 + $0x3b8] sm:$0xff]
  %v719 = vld [vmem:[%s1 + $0x3c0] sm:$0xff]
  %v720 = vld [vmem:[%s1 + $0x3c8] sm:$0xff]
  %v721 = vld [vmem:[%s1 + $0x3d0] sm:$0xff]
  %v722 = vld [vmem:[%s1 + $0x3d8] sm:$0xff]
  %v723 = vld [vmem:[%s1 + $0x3e0] sm:$0xff]
  %v724 = vld [vmem:[%s1 + $0x3e8] sm:$0xff]
  %v725 = vld [vmem:[%s1 + $0x3f0] sm:$0xff]
  %v726 = vld [vmem:[%s1 + $0x3f8] sm:$0xff]
  %v727 = vld [vmem:[%s1 + $0x400] sm:$0xff]
  %v728 = vld [vmem:[%s1 + $0x408] sm:$0xff]
  %v729 = vld [vmem:[%s1 + $0x410] sm:$0xff]
  %v730 = vld [vmem:[%s1 + $0x418] sm:$0xff]
  %v731 = vld [vmem:[%s1 + $0x420] sm:$0xff]
  %v732 = vld [vmem:[%s1 + $0x428] sm:$0xff]
  %v733 = vld [vmem:[%s1 + $0x430] sm:$0xff]
  %v734 = vld [vmem:[%s1 + $0x438] sm:$0xff]
  %v735 = vld [vmem:[%s1 + $0x440] sm:$0xff]
  %v736 = vld [vmem:[%s1 + $0x448] sm:$0xff]
  %v737 = vld [vmem:[%s1 + $0x450] sm:$0xff]
  %v738 = vld [vmem:[%s1 + $0x458] sm:$0xff]
  %v739 = vld [vmem:[%s1 + $0x460] sm:$0xff]
  %v740 = vld [vmem:[%s1 + $0x468] sm:$0xff]
  %v741 = vld [vmem:[%s1 + $0x470] sm:$0xff]
  %v742 = vld [vmem:[%s1 + $0x478] sm:$0xff]
  %v743 = vld [vmem:[%s1 + $0x480] sm:$0xff]
  %v744 = vld [vmem:[%s1 + $0x488] sm:$0xff]
  %v745 = vld [vmem:[%s1 + $0x490] sm:$0xff]
  %v746 = vld [vmem:[%s1 + $0x498] sm:$0xff]
  %v747 = vld [vmem:[%s1 + $0x4a0] sm:$0xff]
  %v748 = vld [vmem:[%s1 + $0x4a8] sm:$0xff]
  %v749 = vld [vmem:[%s1 + $0x4b0] sm:$0xff]
  %v750 = vld [vmem:[%s1 + $0x4b8] sm:$0xff]
  %v751 = vld [vmem:[%s1 + $0x4c0] sm:$0xff]
  %v752 = vld [vmem:[%s1 + $0x4c8] sm:$0xff]
  %v753 = vld [vmem:[%s1 + $0x4d0] sm:$0xff]
  %v754 = vld [vmem:[%s1 + $0x4d8] sm:$0xff]
  %v755 = vld [vmem:[%s1 + $0x4e0] sm:$0xff]
  %v756 = vld [vmem:[%s1 + $0x4e8] sm:$0xff]
  %v757 = vld [vmem:[%s1 + $0x4f0] sm:$0xff]
  %v758 = vld [vmem:[%s1 + $0x4f8] sm:$0xff]
  %v759 = vld [vmem:[%s1 + $0x500] sm:$0xff]
  %v760 = vld [vmem:[%s1 + $0x508] sm:$0xff]
  %v761 = vld [vmem:[%s1 + $0x510] sm:$0xff]
  %v762 = vld [vmem:[%s1 + $0x518] sm:$0xff]
  %v763 = vld [vmem:[%s1 + $0x520] sm:$0xff]
  %v764 = vld [vmem:[%s1 + $0x528] sm:$0xff]
  %v765 = vld [vmem:[%s1 + $0x530] sm:$0xff]
  %v766 = vld [vmem:[%s1 + $0x538] sm:$0xff]
  %768 = vset.pattern.permute.xlu0 0
  %769 = vperm.xlu0 %768, %v432
  %v770 = vpop.permute.xlu0 %769
  %773 = vset.pattern.permute.xlu0 0
  %774 = vperm.xlu0 %773, %v434
  %v775 = vpop.permute.xlu0 %774
  %778 = vset.pattern.permute.xlu0 0
  %779 = vperm.xlu0 %778, %v436
  %v780 = vpop.permute.xlu0 %779
  %783 = vset.pattern.permute.xlu0 0
  %784 = vperm.xlu0 %783, %v438
  %v785 = vpop.permute.xlu0 %784
  %788 = vset.pattern.permute.xlu0 0
  %789 = vperm.xlu0 %788, %v440
  %v790 = vpop.permute.xlu0 %789
  %793 = vset.pattern.permute.xlu0 0
  %794 = vperm.xlu0 %793, %v442
  %v795 = vpop.permute.xlu0 %794
  %798 = vset.pattern.permute.xlu0 0
  %799 = vperm.xlu0 %798, %v444
  %v800 = vpop.permute.xlu0 %799
  %803 = vset.pattern.permute.xlu0 0
  %804 = vperm.xlu0 %803, %v446
  %v805 = vpop.permute.xlu0 %804
  %808 = vset.pattern.permute.xlu0 0
  %809 = vperm.xlu0 %808, %v448
  %v810 = vpop.permute.xlu0 %809
  %813 = vset.pattern.permute.xlu0 0
  %814 = vperm.xlu0 %813, %v450
  %v815 = vpop.permute.xlu0 %814
  %818 = vset.pattern.permute.xlu0 0
  %819 = vperm.xlu0 %818, %v452
  %v820 = vpop.permute.xlu0 %819
  %823 = vset.pattern.permute.xlu0 0
  %824 = vperm.xlu0 %823, %v454
  %v825 = vpop.permute.xlu0 %824
  %828 = vset.pattern.permute.xlu0 0
  %829 = vperm.xlu0 %828, %v456
  %v830 = vpop.permute.xlu0 %829
  %833 = vset.pattern.permute.xlu0 0
  %834 = vperm.xlu0 %833, %v458
  %v835 = vpop.permute.xlu0 %834
  %838 = vset.pattern.permute.xlu0 0
  %839 = vperm.xlu0 %838, %v460
  %v840 = vpop.permute.xlu0 %839
  %843 = vset.pattern.permute.xlu0 0
  %844 = vperm.xlu0 %843, %v462
  %v845 = vpop.permute.xlu0 %844
  %848 = vset.pattern.permute.xlu0 0
  %849 = vperm.xlu0 %848, %v464
  %v850 = vpop.permute.xlu0 %849
  %853 = vset.pattern.permute.xlu0 0
  %854 = vperm.xlu0 %853, %v466
  %v855 = vpop.permute.xlu0 %854
  %858 = vset.pattern.permute.xlu0 0
  %859 = vperm.xlu0 %858, %v468
  %v860 = vpop.permute.xlu0 %859
  %863 = vset.pattern.permute.xlu0 0
  %864 = vperm.xlu0 %863, %v470
  %v865 = vpop.permute.xlu0 %864
  %868 = vset.pattern.permute.xlu0 0
  %869 = vperm.xlu0 %868, %v472
  %v870 = vpop.permute.xlu0 %869
  %873 = vset.pattern.permute.xlu0 0
  %874 = vperm.xlu0 %873, %v474
  %v875 = vpop.permute.xlu0 %874
  %878 = vset.pattern.permute.xlu0 0
  %879 = vperm.xlu0 %878, %v476
  %v880 = vpop.permute.xlu0 %879
  %883 = vset.pattern.permute.xlu0 0
  %884 = vperm.xlu0 %883, %v478
  %v885 = vpop.permute.xlu0 %884
  %888 = vset.pattern.permute.xlu0 0
  %889 = vperm.xlu0 %888, %v480
  %v890 = vpop.permute.xlu0 %889
  %893 = vset.pattern.permute.xlu0 0
  %894 = vperm.xlu0 %893, %v482
  %v895 = vpop.permute.xlu0 %894
  %898 = vset.pattern.permute.xlu0 0
  %899 = vperm.xlu0 %898, %v484
  %v900 = vpop.permute.xlu0 %899
  %903 = vset.pattern.permute.xlu0 0
  %904 = vperm.xlu0 %903, %v486
  %v905 = vpop.permute.xlu0 %904
  %908 = vset.pattern.permute.xlu0 0
  %909 = vperm.xlu0 %908, %v488
  %v910 = vpop.permute.xlu0 %909
  %913 = vset.pattern.permute.xlu0 0
  %914 = vperm.xlu0 %913, %v490
  %v915 = vpop.permute.xlu0 %914
  %918 = vset.pattern.permute.xlu0 0
  %919 = vperm.xlu0 %918, %v492
  %v920 = vpop.permute.xlu0 %919
  %923 = vset.pattern.permute.xlu0 0
  %924 = vperm.xlu0 %923, %v494
  %v925 = vpop.permute.xlu0 %924
  %928 = vset.pattern.permute.xlu0 0
  %929 = vperm.xlu0 %928, %v496
  %v930 = vpop.permute.xlu0 %929
  %933 = vset.pattern.permute.xlu0 0
  %934 = vperm.xlu0 %933, %v498
  %v935 = vpop.permute.xlu0 %934
  %938 = vset.pattern.permute.xlu0 0
  %939 = vperm.xlu0 %938, %v500
  %v940 = vpop.permute.xlu0 %939
  %943 = vset.pattern.permute.xlu0 0
  %944 = vperm.xlu0 %943, %v502
  %v945 = vpop.permute.xlu0 %944
  %948 = vset.pattern.permute.xlu0 0
  %949 = vperm.xlu0 %948, %v504
  %v950 = vpop.permute.xlu0 %949
  %953 = vset.pattern.permute.xlu0 0
  %954 = vperm.xlu0 %953, %v506
  %v955 = vpop.permute.xlu0 %954
  %958 = vset.pattern.permute.xlu0 0
  %959 = vperm.xlu0 %958, %v508
  %v960 = vpop.permute.xlu0 %959
  %963 = vset.pattern.permute.xlu0 0
  %964 = vperm.xlu0 %963, %v510
  %v965 = vpop.permute.xlu0 %964
  %968 = vset.pattern.permute.xlu0 0
  %969 = vperm.xlu0 %968, %v512
  %v970 = vpop.permute.xlu0 %969
  %973 = vset.pattern.permute.xlu0 0
  %974 = vperm.xlu0 %973, %v514
  %v975 = vpop.permute.xlu0 %974
  %978 = vset.pattern.permute.xlu0 0
  %979 = vperm.xlu0 %978, %v516
  %v980 = vpop.permute.xlu0 %979
  %983 = vset.pattern.permute.xlu0 0
  %984 = vperm.xlu0 %983, %v518
  %v985 = vpop.permute.xlu0 %984
  %988 = vset.pattern.permute.xlu0 0
  %989 = vperm.xlu0 %988, %v520
  %v990 = vpop.permute.xlu0 %989
  %993 = vset.pattern.permute.xlu0 0
  %994 = vperm.xlu0 %993, %v522
  %v995 = vpop.permute.xlu0 %994
  %998 = vset.pattern.permute.xlu0 0
  %999 = vperm.xlu0 %998, %v524
  %v1000 = vpop.permute.xlu0 %999
  %1003 = vset.pattern.permute.xlu0 0
  %1004 = vperm.xlu0 %1003, %v526
  %v1005 = vpop.permute.xlu0 %1004
  %1008 = vset.pattern.permute.xlu0 0
  %1009 = vperm.xlu0 %1008, %v528
  %v1010 = vpop.permute.xlu0 %1009
  %1013 = vset.pattern.permute.xlu0 0
  %1014 = vperm.xlu0 %1013, %v530
  %v1015 = vpop.permute.xlu0 %1014
  %1018 = vset.pattern.permute.xlu0 0
  %1019 = vperm.xlu0 %1018, %v532
  %v1020 = vpop.permute.xlu0 %1019
  %1023 = vset.pattern.permute.xlu0 0
  %1024 = vperm.xlu0 %1023, %v534
  %v1025 = vpop.permute.xlu0 %1024
  %1028 = vset.pattern.permute.xlu0 0
  %1029 = vperm.xlu0 %1028, %v536
  %v1030 = vpop.permute.xlu0 %1029
  %1033 = vset.pattern.permute.xlu0 0
  %1034 = vperm.xlu0 %1033, %v538
  %v1035 = vpop.permute.xlu0 %1034
  %1038 = vset.pattern.permute.xlu0 0
  %1039 = vperm.xlu0 %1038, %v540
  %v1040 = vpop.permute.xlu0 %1039
  %1043 = vset.pattern.permute.xlu0 0
  %1044 = vperm.xlu0 %1043, %v542
  %v1045 = vpop.permute.xlu0 %1044
  %1048 = vset.pattern.permute.xlu0 0
  %1049 = vperm.xlu0 %1048, %v544
  %v1050 = vpop.permute.xlu0 %1049
  %1053 = vset.pattern.permute.xlu0 0
  %1054 = vperm.xlu0 %1053, %v546
  %v1055 = vpop.permute.xlu0 %1054
  %1058 = vset.pattern.permute.xlu0 0
  %1059 = vperm.xlu0 %1058, %v548
  %v1060 = vpop.permute.xlu0 %1059
  %1063 = vset.pattern.permute.xlu0 0
  %1064 = vperm.xlu0 %1063, %v550
  %v1065 = vpop.permute.xlu0 %1064
  %1068 = vset.pattern.permute.xlu0 0
  %1069 = vperm.xlu0 %1068, %v552
  %v1070 = vpop.permute.xlu0 %1069
  %1073 = vset.pattern.permute.xlu0 0
  %1074 = vperm.xlu0 %1073, %v554
  %v1075 = vpop.permute.xlu0 %1074
  %1078 = vset.pattern.permute.xlu0 0
  %1079 = vperm.xlu0 %1078, %v556
  %v1080 = vpop.permute.xlu0 %1079
  %1083 = vset.pattern.permute.xlu0 0
  %1084 = vperm.xlu0 %1083, %v558
  %v1085 = vpop.permute.xlu0 %1084
  %1088 = vset.pattern.permute.xlu0 0
  %1089 = vperm.xlu0 %1088, %v560
  %v1090 = vpop.permute.xlu0 %1089
  %1093 = vset.pattern.permute.xlu0 0
  %1094 = vperm.xlu0 %1093, %v562
  %v1095 = vpop.permute.xlu0 %1094
  %1098 = vset.pattern.permute.xlu0 0
  %1099 = vperm.xlu0 %1098, %v564
  %v1100 = vpop.permute.xlu0 %1099
  %1103 = vset.pattern.permute.xlu0 0
  %1104 = vperm.xlu0 %1103, %v566
  %v1105 = vpop.permute.xlu0 %1104
  %1108 = vset.pattern.permute.xlu0 0
  %1109 = vperm.xlu0 %1108, %v568
  %v1110 = vpop.permute.xlu0 %1109
  %1113 = vset.pattern.permute.xlu0 0
  %1114 = vperm.xlu0 %1113, %v570
  %v1115 = vpop.permute.xlu0 %1114
  %1118 = vset.pattern.permute.xlu0 0
  %1119 = vperm.xlu0 %1118, %v572
  %v1120 = vpop.permute.xlu0 %1119
  %1123 = vset.pattern.permute.xlu0 0
  %1124 = vperm.xlu0 %1123, %v574
  %v1125 = vpop.permute.xlu0 %1124
  %1128 = vset.pattern.permute.xlu0 0
  %1129 = vperm.xlu0 %1128, %v576
  %v1130 = vpop.permute.xlu0 %1129
  %1133 = vset.pattern.permute.xlu0 0
  %1134 = vperm.xlu0 %1133, %v578
  %v1135 = vpop.permute.xlu0 %1134
  %1138 = vset.pattern.permute.xlu0 0
  %1139 = vperm.xlu0 %1138, %v580
  %v1140 = vpop.permute.xlu0 %1139
  %1143 = vset.pattern.permute.xlu0 0
  %1144 = vperm.xlu0 %1143, %v582
  %v1145 = vpop.permute.xlu0 %1144
  %1148 = vset.pattern.permute.xlu0 0
  %1149 = vperm.xlu0 %1148, %v584
  %v1150 = vpop.permute.xlu0 %1149
  %1153 = vset.pattern.permute.xlu0 0
  %1154 = vperm.xlu0 %1153, %v586
  %v1155 = vpop.permute.xlu0 %1154
  %1158 = vset.pattern.permute.xlu0 0
  %1159 = vperm.xlu0 %1158, %v588
  %v1160 = vpop.permute.xlu0 %1159
  %1163 = vset.pattern.permute.xlu0 0
  %1164 = vperm.xlu0 %1163, %v590
  %v1165 = vpop.permute.xlu0 %1164
  %1168 = vset.pattern.permute.xlu0 0
  %1169 = vperm.xlu0 %1168, %v592
  %v1170 = vpop.permute.xlu0 %1169
  %1173 = vset.pattern.permute.xlu0 0
  %1174 = vperm.xlu0 %1173, %v594
  %v1175 = vpop.permute.xlu0 %1174
  %1178 = vset.pattern.permute.xlu0 0
  %1179 = vperm.xlu0 %1178, %v596
  %v1180 = vpop.permute.xlu0 %1179
  %1183 = vset.pattern.permute.xlu0 0
  %1184 = vperm.xlu0 %1183, %v598
  %v1185 = vpop.permute.xlu0 %1184
  %v1187 = vmul.f32 %v770, %v599
  %v1188 = vmul.f32 %v770, %v600
  %v1189 = vmul.f32 %v775, %v601
  %v1190 = vmul.f32 %v775, %v602
  %v1191 = vmul.f32 %v780, %v603
  %v1192 = vmul.f32 %v780, %v604
  %v1193 = vmul.f32 %v785, %v605
  %v1194 = vmul.f32 %v785, %v606
  %v1195 = vmul.f32 %v790, %v607
  %v1196 = vmul.f32 %v790, %v608
  %v1197 = vmul.f32 %v795, %v609
  %v1198 = vmul.f32 %v795, %v610
  %v1199 = vmul.f32 %v800, %v611
  %v1200 = vmul.f32 %v800, %v612
  %v1201 = vmul.f32 %v805, %v613
  %v1202 = vmul.f32 %v805, %v614
  %v1203 = vmul.f32 %v810, %v615
  %v1204 = vmul.f32 %v810, %v616
  %v1205 = vmul.f32 %v815, %v617
  %v1206 = vmul.f32 %v815, %v618
  %v1207 = vmul.f32 %v820, %v619
  %v1208 = vmul.f32 %v820, %v620
  %v1209 = vmul.f32 %v825, %v621
  %v1210 = vmul.f32 %v825, %v622
  %v1211 = vmul.f32 %v830, %v623
  %v1212 = vmul.f32 %v830, %v624
  %v1213 = vmul.f32 %v835, %v625
  %v1214 = vmul.f32 %v835, %v626
  %v1215 = vmul.f32 %v840, %v627
  %v1216 = vmul.f32 %v840, %v628
  %v1217 = vmul.f32 %v845, %v629
  %v1218 = vmul.f32 %v845, %v630
  %v1219 = vmul.f32 %v850, %v631
  %v1220 = vmul.f32 %v850, %v632
  %v1221 = vmul.f32 %v855, %v633
  %v1222 = vmul.f32 %v855, %v634
  %v1223 = vmul.f32 %v860, %v635
  %v1224 = vmul.f32 %v860, %v636
  %v1225 = vmul.f32 %v865, %v637
  %v1226 = vmul.f32 %v865, %v638
  %v1227 = vmul.f32 %v870, %v639
  %v1228 = vmul.f32 %v870, %v640
  %v1229 = vmul.f32 %v875, %v641
  %v1230 = vmul.f32 %v875, %v642
  %v1231 = vmul.f32 %v880, %v643
  %v1232 = vmul.f32 %v880, %v644
  %v1233 = vmul.f32 %v885, %v645
  %v1234 = vmul.f32 %v885, %v646
  %v1235 = vmul.f32 %v890, %v647
  %v1236 = vmul.f32 %v890, %v648
  %v1237 = vmul.f32 %v895, %v649
  %v1238 = vmul.f32 %v895, %v650
  %v1239 = vmul.f32 %v900, %v651
  %v1240 = vmul.f32 %v900, %v652
  %v1241 = vmul.f32 %v905, %v653
  %v1242 = vmul.f32 %v905, %v654
  %v1243 = vmul.f32 %v910, %v655
  %v1244 = vmul.f32 %v910, %v656
  %v1245 = vmul.f32 %v915, %v657
  %v1246 = vmul.f32 %v915, %v658
  %v1247 = vmul.f32 %v920, %v659
  %v1248 = vmul.f32 %v920, %v660
  %v1249 = vmul.f32 %v925, %v661
  %v1250 = vmul.f32 %v925, %v662
  %v1251 = vmul.f32 %v930, %v663
  %v1252 = vmul.f32 %v930, %v664
  %v1253 = vmul.f32 %v935, %v665
  %v1254 = vmul.f32 %v935, %v666
  %v1255 = vmul.f32 %v940, %v667
  %v1256 = vmul.f32 %v940, %v668
  %v1257 = vmul.f32 %v945, %v669
  %v1258 = vmul.f32 %v945, %v670
  %v1259 = vmul.f32 %v950, %v671
  %v1260 = vmul.f32 %v950, %v672
  %v1261 = vmul.f32 %v955, %v673
  %v1262 = vmul.f32 %v955, %v674
  %v1263 = vmul.f32 %v960, %v675
  %v1264 = vmul.f32 %v960, %v676
  %v1265 = vmul.f32 %v965, %v677
  %v1266 = vmul.f32 %v965, %v678
  %v1267 = vmul.f32 %v970, %v679
  %v1268 = vmul.f32 %v970, %v680
  %v1269 = vmul.f32 %v975, %v681
  %v1270 = vmul.f32 %v975, %v682
  %v1271 = vmul.f32 %v980, %v683
  %v1272 = vmul.f32 %v980, %v684
  %v1273 = vmul.f32 %v985, %v685
  %v1274 = vmul.f32 %v985, %v686
  %v1275 = vmul.f32 %v990, %v687
  %v1276 = vmul.f32 %v990, %v688
  %v1277 = vmul.f32 %v995, %v689
  %v1278 = vmul.f32 %v995, %v690
  %v1279 = vmul.f32 %v1000, %v691
  %v1280 = vmul.f32 %v1000, %v692
  %v1281 = vmul.f32 %v1005, %v693
  %v1282 = vmul.f32 %v1005, %v694
  %v1283 = vmul.f32 %v1010, %v695
  %v1284 = vmul.f32 %v1010, %v696
  %v1285 = vmul.f32 %v1015, %v697
  %v1286 = vmul.f32 %v1015, %v698
  %v1287 = vmul.f32 %v1020, %v699
  %v1288 = vmul.f32 %v1020, %v700
  %v1289 = vmul.f32 %v1025, %v701
  %v1290 = vmul.f32 %v1025, %v702
  %v1291 = vmul.f32 %v1030, %v703
  %v1292 = vmul.f32 %v1030, %v704
  %v1293 = vmul.f32 %v1035, %v705
  %v1294 = vmul.f32 %v1035, %v706
  %v1295 = vmul.f32 %v1040, %v707
  %v1296 = vmul.f32 %v1040, %v708
  %v1297 = vmul.f32 %v1045, %v709
  %v1298 = vmul.f32 %v1045, %v710
  %v1299 = vmul.f32 %v1050, %v711
  %v1300 = vmul.f32 %v1050, %v712
  %v1301 = vmul.f32 %v1055, %v713
  %v1302 = vmul.f32 %v1055, %v714
  %v1303 = vmul.f32 %v1060, %v715
  %v1304 = vmul.f32 %v1060, %v716
  %v1305 = vmul.f32 %v1065, %v717
  %v1306 = vmul.f32 %v1065, %v718
  %v1307 = vmul.f32 %v1070, %v719
  %v1308 = vmul.f32 %v1070, %v720
  %v1309 = vmul.f32 %v1075, %v721
  %v1310 = vmul.f32 %v1075, %v722
  %v1311 = vmul.f32 %v1080, %v723
  %v1312 = vmul.f32 %v1080, %v724
  %v1313 = vmul.f32 %v1085, %v725
  %v1314 = vmul.f32 %v1085, %v726
  %v1315 = vmul.f32 %v1090, %v727
  %v1316 = vmul.f32 %v1090, %v728
  %v1317 = vmul.f32 %v1095, %v729
  %v1318 = vmul.f32 %v1095, %v730
  %v1319 = vmul.f32 %v1100, %v731
  %v1320 = vmul.f32 %v1100, %v732
  %v1321 = vmul.f32 %v1105, %v733
  %v1322 = vmul.f32 %v1105, %v734
  %v1323 = vmul.f32 %v1110, %v735
  %v1324 = vmul.f32 %v1110, %v736
  %v1325 = vmul.f32 %v1115, %v737
  %v1326 = vmul.f32 %v1115, %v738
  %v1327 = vmul.f32 %v1120, %v739
  %v1328 = vmul.f32 %v1120, %v740
  %v1329 = vmul.f32 %v1125, %v741
  %v1330 = vmul.f32 %v1125, %v742
  %v1331 = vmul.f32 %v1130, %v743
  %v1332 = vmul.f32 %v1130, %v744
  %v1333 = vmul.f32 %v1135, %v745
  %v1334 = vmul.f32 %v1135, %v746
  %v1335 = vmul.f32 %v1140, %v747
  %v1336 = vmul.f32 %v1140, %v748
  %v1337 = vmul.f32 %v1145, %v749
  %v1338 = vmul.f32 %v1145, %v750
  %v1339 = vmul.f32 %v1150, %v751
  %v1340 = vmul.f32 %v1150, %v752
  %v1341 = vmul.f32 %v1155, %v753
  %v1342 = vmul.f32 %v1155, %v754
  %v1343 = vmul.f32 %v1160, %v755
  %v1344 = vmul.f32 %v1160, %v756
  %v1345 = vmul.f32 %v1165, %v757
  %v1346 = vmul.f32 %v1165, %v758
  %v1347 = vmul.f32 %v1170, %v759
  %v1348 = vmul.f32 %v1170, %v760
  %v1349 = vmul.f32 %v1175, %v761
  %v1350 = vmul.f32 %v1175, %v762
  %v1351 = vmul.f32 %v1180, %v763
  %v1352 = vmul.f32 %v1180, %v764
  %v1353 = vmul.f32 %v1185, %v765
  %v1354 = vmul.f32 %v1185, %v766
  %1355 = vst [vmem:[%s2] sm:$0xff] %v1187
  %vm1356 = vcmask 556032
  %1357 = vst.msk [vmem:[%s2 + $0x8] sm:$0xff] %vm1356, %v1188
  %1358 = vst [vmem:[%s2 + $0x10] sm:$0xff] %v1189
  %1359 = vst.msk [vmem:[%s2 + $0x18] sm:$0xff] %vm1356, %v1190
  %1360 = vst [vmem:[%s2 + $0x20] sm:$0xff] %v1191
  %1361 = vst.msk [vmem:[%s2 + $0x28] sm:$0xff] %vm1356, %v1192
  %1362 = vst [vmem:[%s2 + $0x30] sm:$0xff] %v1193
  %1363 = vst.msk [vmem:[%s2 + $0x38] sm:$0xff] %vm1356, %v1194
  %1364 = vst [vmem:[%s2 + $0x40] sm:$0xff] %v1195
  %1365 = vst.msk [vmem:[%s2 + $0x48] sm:$0xff] %vm1356, %v1196
  %1366 = vst [vmem:[%s2 + $0x50] sm:$0xff] %v1197
  %1367 = vst.msk [vmem:[%s2 + $0x58] sm:$0xff] %vm1356, %v1198
  %1368 = vst [vmem:[%s2 + $0x60] sm:$0xff] %v1199
  %1369 = vst.msk [vmem:[%s2 + $0x68] sm:$0xff] %vm1356, %v1200
  %1370 = vst [vmem:[%s2 + $0x70] sm:$0xff] %v1201
  %1371 = vst.msk [vmem:[%s2 + $0x78] sm:$0xff] %vm1356, %v1202
  %1372 = vst [vmem:[%s2 + $0x80] sm:$0xff] %v1203
  %1373 = vst.msk [vmem:[%s2 + $0x88] sm:$0xff] %vm1356, %v1204
  %1374 = vst [vmem:[%s2 + $0x90] sm:$0xff] %v1205
  %1375 = vst.msk [vmem:[%s2 + $0x98] sm:$0xff] %vm1356, %v1206
  %1376 = vst [vmem:[%s2 + $0xa0] sm:$0xff] %v1207
  %1377 = vst.msk [vmem:[%s2 + $0xa8] sm:$0xff] %vm1356, %v1208
  %1378 = vst [vmem:[%s2 + $0xb0] sm:$0xff] %v1209
  %1379 = vst.msk [vmem:[%s2 + $0xb8] sm:$0xff] %vm1356, %v1210
  %1380 = vst [vmem:[%s2 + $0xc0] sm:$0xff] %v1211
  %1381 = vst.msk [vmem:[%s2 + $0xc8] sm:$0xff] %vm1356, %v1212
  %1382 = vst [vmem:[%s2 + $0xd0] sm:$0xff] %v1213
  %1383 = vst.msk [vmem:[%s2 + $0xd8] sm:$0xff] %vm1356, %v1214
  %1384 = vst [vmem:[%s2 + $0xe0] sm:$0xff] %v1215
  %1385 = vst.msk [vmem:[%s2 + $0xe8] sm:$0xff] %vm1356, %v1216
  %1386 = vst [vmem:[%s2 + $0xf0] sm:$0xff] %v1217
  %1387 = vst.msk [vmem:[%s2 + $0xf8] sm:$0xff] %vm1356, %v1218
  %1388 = vst [vmem:[%s2 + $0x100] sm:$0xff] %v1219
  %1389 = vst.msk [vmem:[%s2 + $0x108] sm:$0xff] %vm1356, %v1220
  %1390 = vst [vmem:[%s2 + $0x110] sm:$0xff] %v1221
  %1391 = vst.msk [vmem:[%s2 + $0x118] sm:$0xff] %vm1356, %v1222
  %1392 = vst [vmem:[%s2 + $0x120] sm:$0xff] %v1223
  %1393 = vst.msk [vmem:[%s2 + $0x128] sm:$0xff] %vm1356, %v1224
  %1394 = vst [vmem:[%s2 + $0x130] sm:$0xff] %v1225
  %1395 = vst.msk [vmem:[%s2 + $0x138] sm:$0xff] %vm1356, %v1226
  %1396 = vst [vmem:[%s2 + $0x140] sm:$0xff] %v1227
  %1397 = vst.msk [vmem:[%s2 + $0x148] sm:$0xff] %vm1356, %v1228
  %1398 = vst [vmem:[%s2 + $0x150] sm:$0xff] %v1229
  %1399 = vst.msk [vmem:[%s2 + $0x158] sm:$0xff] %vm1356, %v1230
  %1400 = vst [vmem:[%s2 + $0x160] sm:$0xff] %v1231
  %1401 = vst.msk [vmem:[%s2 + $0x168] sm:$0xff] %vm1356, %v1232
  %1402 = vst [vmem:[%s2 + $0x170] sm:$0xff] %v1233
  %1403 = vst.msk [vmem:[%s2 + $0x178] sm:$0xff] %vm1356, %v1234
  %1404 = vst [vmem:[%s2 + $0x180] sm:$0xff] %v1235
  %1405 = vst.msk [vmem:[%s2 + $0x188] sm:$0xff] %vm1356, %v1236
  %1406 = vst [vmem:[%s2 + $0x190] sm:$0xff] %v1237
  %1407 = vst.msk [vmem:[%s2 + $0x198] sm:$0xff] %vm1356, %v1238
  %1408 = vst [vmem:[%s2 + $0x1a0] sm:$0xff] %v1239
  %1409 = vst.msk [vmem:[%s2 + $0x1a8] sm:$0xff] %vm1356, %v1240
  %1410 = vst [vmem:[%s2 + $0x1b0] sm:$0xff] %v1241
  %1411 = vst.msk [vmem:[%s2 + $0x1b8] sm:$0xff] %vm1356, %v1242
  %1412 = vst [vmem:[%s2 + $0x1c0] sm:$0xff] %v1243
  %1413 = vst.msk [vmem:[%s2 + $0x1c8] sm:$0xff] %vm1356, %v1244
  %1414 = vst [vmem:[%s2 + $0x1d0] sm:$0xff] %v1245
  %1415 = vst.msk [vmem:[%s2 + $0x1d8] sm:$0xff] %vm1356, %v1246
  %1416 = vst [vmem:[%s2 + $0x1e0] sm:$0xff] %v1247
  %1417 = vst.msk [vmem:[%s2 + $0x1e8] sm:$0xff] %vm1356, %v1248
  %1418 = vst [vmem:[%s2 + $0x1f0] sm:$0xff] %v1249
  %1419 = vst.msk [vmem:[%s2 + $0x1f8] sm:$0xff] %vm1356, %v1250
  %1420 = vst [vmem:[%s2 + $0x200] sm:$0xff] %v1251
  %1421 = vst.msk [vmem:[%s2 + $0x208] sm:$0xff] %vm1356, %v1252
  %1422 = vst [vmem:[%s2 + $0x210] sm:$0xff] %v1253
  %1423 = vst.msk [vmem:[%s2 + $0x218] sm:$0xff] %vm1356, %v1254
  %1424 = vst [vmem:[%s2 + $0x220] sm:$0xff] %v1255
  %1425 = vst.msk [vmem:[%s2 + $0x228] sm:$0xff] %vm1356, %v1256
  %1426 = vst [vmem:[%s2 + $0x230] sm:$0xff] %v1257
  %1427 = vst.msk [vmem:[%s2 + $0x238] sm:$0xff] %vm1356, %v1258
  %1428 = vst [vmem:[%s2 + $0x240] sm:$0xff] %v1259
  %1429 = vst.msk [vmem:[%s2 + $0x248] sm:$0xff] %vm1356, %v1260
  %1430 = vst [vmem:[%s2 + $0x250] sm:$0xff] %v1261
  %1431 = vst.msk [vmem:[%s2 + $0x258] sm:$0xff] %vm1356, %v1262
  %1432 = vst [vmem:[%s2 + $0x260] sm:$0xff] %v1263
  %1433 = vst.msk [vmem:[%s2 + $0x268] sm:$0xff] %vm1356, %v1264
  %1434 = vst [vmem:[%s2 + $0x270] sm:$0xff] %v1265
  %1435 = vst.msk [vmem:[%s2 + $0x278] sm:$0xff] %vm1356, %v1266
  %1436 = vst [vmem:[%s2 + $0x280] sm:$0xff] %v1267
  %1437 = vst.msk [vmem:[%s2 + $0x288] sm:$0xff] %vm1356, %v1268
  %1438 = vst [vmem:[%s2 + $0x290] sm:$0xff] %v1269
  %1439 = vst.msk [vmem:[%s2 + $0x298] sm:$0xff] %vm1356, %v1270
  %1440 = vst [vmem:[%s2 + $0x2a0] sm:$0xff] %v1271
  %1441 = vst.msk [vmem:[%s2 + $0x2a8] sm:$0xff] %vm1356, %v1272
  %1442 = vst [vmem:[%s2 + $0x2b0] sm:$0xff] %v1273
  %1443 = vst.msk [vmem:[%s2 + $0x2b8] sm:$0xff] %vm1356, %v1274
  %1444 = vst [vmem:[%s2 + $0x2c0] sm:$0xff] %v1275
  %1445 = vst.msk [vmem:[%s2 + $0x2c8] sm:$0xff] %vm1356, %v1276
  %1446 = vst [vmem:[%s2 + $0x2d0] sm:$0xff] %v1277
  %1447 = vst.msk [vmem:[%s2 + $0x2d8] sm:$0xff] %vm1356, %v1278
  %1448 = vst [vmem:[%s2 + $0x2e0] sm:$0xff] %v1279
  %1449 = vst.msk [vmem:[%s2 + $0x2e8] sm:$0xff] %vm1356, %v1280
  %1450 = vst [vmem:[%s2 + $0x2f0] sm:$0xff] %v1281
  %1451 = vst.msk [vmem:[%s2 + $0x2f8] sm:$0xff] %vm1356, %v1282
  %1452 = vst [vmem:[%s2 + $0x300] sm:$0xff] %v1283
  %1453 = vst.msk [vmem:[%s2 + $0x308] sm:$0xff] %vm1356, %v1284
  %1454 = vst [vmem:[%s2 + $0x310] sm:$0xff] %v1285
  %1455 = vst.msk [vmem:[%s2 + $0x318] sm:$0xff] %vm1356, %v1286
  %1456 = vst [vmem:[%s2 + $0x320] sm:$0xff] %v1287
  %1457 = vst.msk [vmem:[%s2 + $0x328] sm:$0xff] %vm1356, %v1288
  %1458 = vst [vmem:[%s2 + $0x330] sm:$0xff] %v1289
  %1459 = vst.msk [vmem:[%s2 + $0x338] sm:$0xff] %vm1356, %v1290
  %1460 = vst [vmem:[%s2 + $0x340] sm:$0xff] %v1291
  %1461 = vst.msk [vmem:[%s2 + $0x348] sm:$0xff] %vm1356, %v1292
  %1462 = vst [vmem:[%s2 + $0x350] sm:$0xff] %v1293
  %1463 = vst.msk [vmem:[%s2 + $0x358] sm:$0xff] %vm1356, %v1294
  %1464 = vst [vmem:[%s2 + $0x360] sm:$0xff] %v1295
  %1465 = vst.msk [vmem:[%s2 + $0x368] sm:$0xff] %vm1356, %v1296
  %1466 = vst [vmem:[%s2 + $0x370] sm:$0xff] %v1297
  %1467 = vst.msk [vmem:[%s2 + $0x378] sm:$0xff] %vm1356, %v1298
  %1468 = vst [vmem:[%s2 + $0x380] sm:$0xff] %v1299
  %1469 = vst.msk [vmem:[%s2 + $0x388] sm:$0xff] %vm1356, %v1300
  %1470 = vst [vmem:[%s2 + $0x390] sm:$0xff] %v1301
  %1471 = vst.msk [vmem:[%s2 + $0x398] sm:$0xff] %vm1356, %v1302
  %1472 = vst [vmem:[%s2 + $0x3a0] sm:$0xff] %v1303
  %1473 = vst.msk [vmem:[%s2 + $0x3a8] sm:$0xff] %vm1356, %v1304
  %1474 = vst [vmem:[%s2 + $0x3b0] sm:$0xff] %v1305
  %1475 = vst.msk [vmem:[%s2 + $0x3b8] sm:$0xff] %vm1356, %v1306
  %1476 = vst [vmem:[%s2 + $0x3c0] sm:$0xff] %v1307
  %1477 = vst.msk [vmem:[%s2 + $0x3c8] sm:$0xff] %vm1356, %v1308
  %1478 = vst [vmem:[%s2 + $0x3d0] sm:$0xff] %v1309
  %1479 = vst.msk [vmem:[%s2 + $0x3d8] sm:$0xff] %vm1356, %v1310
  %1480 = vst [vmem:[%s2 + $0x3e0] sm:$0xff] %v1311
  %1481 = vst.msk [vmem:[%s2 + $0x3e8] sm:$0xff] %vm1356, %v1312
  %1482 = vst [vmem:[%s2 + $0x3f0] sm:$0xff] %v1313
  %1483 = vst.msk [vmem:[%s2 + $0x3f8] sm:$0xff] %vm1356, %v1314
  %1484 = vst [vmem:[%s2 + $0x400] sm:$0xff] %v1315
  %1485 = vst.msk [vmem:[%s2 + $0x408] sm:$0xff] %vm1356, %v1316
  %1486 = vst [vmem:[%s2 + $0x410] sm:$0xff] %v1317
  %1487 = vst.msk [vmem:[%s2 + $0x418] sm:$0xff] %vm1356, %v1318
  %1488 = vst [vmem:[%s2 + $0x420] sm:$0xff] %v1319
  %1489 = vst.msk [vmem:[%s2 + $0x428] sm:$0xff] %vm1356, %v1320
  %1490 = vst [vmem:[%s2 + $0x430] sm:$0xff] %v1321
  %1491 = vst.msk [vmem:[%s2 + $0x438] sm:$0xff] %vm1356, %v1322
  %1492 = vst [vmem:[%s2 + $0x440] sm:$0xff] %v1323
  %1493 = vst.msk [vmem:[%s2 + $0x448] sm:$0xff] %vm1356, %v1324
  %1494 = vst [vmem:[%s2 + $0x450] sm:$0xff] %v1325
  %1495 = vst.msk [vmem:[%s2 + $0x458] sm:$0xff] %vm1356, %v1326
  %1496 = vst [vmem:[%s2 + $0x460] sm:$0xff] %v1327
  %1497 = vst.msk [vmem:[%s2 + $0x468] sm:$0xff] %vm1356, %v1328
  %1498 = vst [vmem:[%s2 + $0x470] sm:$0xff] %v1329
  %1499 = vst.msk [vmem:[%s2 + $0x478] sm:$0xff] %vm1356, %v1330
  %1500 = vst [vmem:[%s2 + $0x480] sm:$0xff] %v1331
  %1501 = vst.msk [vmem:[%s2 + $0x488] sm:$0xff] %vm1356, %v1332
  %1502 = vst [vmem:[%s2 + $0x490] sm:$0xff] %v1333
  %1503 = vst.msk [vmem:[%s2 + $0x498] sm:$0xff] %vm1356, %v1334
  %1504 = vst [vmem:[%s2 + $0x4a0] sm:$0xff] %v1335
  %1505 = vst.msk [vmem:[%s2 + $0x4a8] sm:$0xff] %vm1356, %v1336
  %1506 = vst [vmem:[%s2 + $0x4b0] sm:$0xff] %v1337
  %1507 = vst.msk [vmem:[%s2 + $0x4b8] sm:$0xff] %vm1356, %v1338
  %1508 = vst [vmem:[%s2 + $0x4c0] sm:$0xff] %v1339
  %1509 = vst.msk [vmem:[%s2 + $0x4c8] sm:$0xff] %vm1356, %v1340
  %1510 = vst [vmem:[%s2 + $0x4d0] sm:$0xff] %v1341
  %1511 = vst.msk [vmem:[%s2 + $0x4d8] sm:$0xff] %vm1356, %v1342
  %1512 = vst [vmem:[%s2 + $0x4e0] sm:$0xff] %v1343
  %1513 = vst.msk [vmem:[%s2 + $0x4e8] sm:$0xff] %vm1356, %v1344
  %1514 = vst [vmem:[%s2 + $0x4f0] sm:$0xff] %v1345
  %1515 = vst.msk [vmem:[%s2 + $0x4f8] sm:$0xff] %vm1356, %v1346
  %1516 = vst [vmem:[%s2 + $0x500] sm:$0xff] %v1347
  %1517 = vst.msk [vmem:[%s2 + $0x508] sm:$0xff] %vm1356, %v1348
  %1518 = vst [vmem:[%s2 + $0x510] sm:$0xff] %v1349
  %1519 = vst.msk [vmem:[%s2 + $0x518] sm:$0xff] %vm1356, %v1350
  %1520 = vst [vmem:[%s2 + $0x520] sm:$0xff] %v1351
  %1521 = vst.msk [vmem:[%s2 + $0x528] sm:$0xff] %vm1356, %v1352
  %1522 = vst [vmem:[%s2 + $0x530] sm:$0xff] %v1353
  %1523 = vst.msk [vmem:[%s2 + $0x538] sm:$0xff] %vm1356, %v1354
  // Predicated region
  $region10: #{tpu_custom_call.1} parent=0 // pred_check
    _
  $region11: #{tpu_custom_call.1} parent=0 // pred_check_branch
    %1525 = sbr.rel (0) target = $region13
  $region12: #{tpu_custom_call.1} parent=0 // pred_region
    _
  $region13: #{tpu_custom_call.1} parent=0 // pred_fallthru
    _
  // Predicated region
  $region14: #{tpu_custom_call.1} parent=0 // pred_check
    _
  $region15: #{tpu_custom_call.1} parent=0 // pred_check_branch
    %1527 = sbr.rel (0) target = $region17
  $region16: #{tpu_custom_call.1} parent=0 // pred_region
    _
  $region17: #{tpu_custom_call.1} parent=0 // pred_fallthru
    _

</llo_original>
